<compile_context>
chip_gen: v5e
topology: v5e:2x2
jax: 0.10.0
libtpu: 0.0.40
codegen_flags: <defaults>
</compile_context>

<pallas_src>
import functools
import math

import numpy as np
import jax
import jax.numpy as jnp
from jax.experimental import pallas as pl
from jax.experimental.pallas import tpu as pltpu


def _round_up(a, b):
    return (a + b - 1) // b * b


def _pow_int(x, n):
    """x ** n for a static positive integer n via multiplies (VPU only)."""
    result = None
    base = x
    while n:
        if n & 1:
            result = base if result is None else result * base
        n >>= 1
        if n:
            base = base * base
    return result


def _finalize(s, p_ref, *, eps, n_valid, pad_count, p_int, out_dtype):
    """row-sum of clamp(x)^p -> GeM output (pad correction, mean, **(1/p))."""
    if pad_count:  # static: only when N was padded
        if p_int is not None:
            s = s - float(pad_count) * (float(eps) ** p_int)
        else:
            p = p_ref[0]
            s = s - float(pad_count) * jnp.exp(p * jnp.full_like(s, math.log(eps)))
    mean = s * (1.0 / n_valid)
    if p_int is not None:
        out = jnp.exp(jnp.log(mean) * (1.0 / float(p_int)))
    else:
        out = jnp.exp(jnp.log(mean) / p_ref[0])
    return out.astype(out_dtype)


# ---------------------------------------------------------------------------
# Single-pass kernel: the whole (padded) N axis fits one block.
# ---------------------------------------------------------------------------
def gem_single_kernel(p_ref, x_ref, o_ref, *, eps, n_valid, pad_count, p_int):
    x = x_ref[...].astype(jnp.float32)                 # (tm, Np)
    xc = jnp.maximum(x, eps)
    if p_int is not None:
        xp = _pow_int(xc, p_int)                       # VPU-only pow
    else:
        xp = jnp.exp(p_ref[0] * jnp.log(xc))           # EUP transcendentals
    s = jnp.sum(xp, axis=-1, keepdims=True)            # (tm, 1)
    o_ref[...] = _finalize(s, p_ref, eps=eps, n_valid=n_valid,
                           pad_count=pad_count, p_int=p_int,
                           out_dtype=o_ref.dtype)


# ---------------------------------------------------------------------------
# Multi-step kernel: N tiled along the last grid axis, lane-dense accumulator.
# ---------------------------------------------------------------------------
def gem_multi_kernel(p_ref, x_ref, o_ref, acc_ref, *, eps, n_valid, pad_count,
                     p_int, tn):
    j = pl.program_id(1)

    @pl.when(j == 0)
    def _init():
        acc_ref[...] = jnp.zeros_like(acc_ref)

    x = x_ref[...].astype(jnp.float32)                 # (tm, tn)
    xc = jnp.maximum(x, eps)
    if p_int is not None:
        xp = _pow_int(xc, p_int)
    else:
        xp = jnp.exp(p_ref[0] * jnp.log(xc))

    # Lane-dense accumulation: plain VPU adds over 128-wide aligned slices;
    # the cross-lane XLU reduce happens once, in the finalize branch.
    partial = xp[:, 0:128]
    for c in range(1, tn // 128):
        partial = partial + xp[:, c * 128:(c + 1) * 128]
    acc_ref[...] += partial

    @pl.when(j == pl.num_programs(1) - 1)
    def _done():
        s = jnp.sum(acc_ref[...], axis=-1, keepdims=True)
        o_ref[...] = _finalize(s, p_ref, eps=eps, n_valid=n_valid,
                               pad_count=pad_count, p_int=p_int,
                               out_dtype=o_ref.dtype)


# ---------------------------------------------------------------------------
# Wrapper: (B, C, N) -> (B, C, 1), exactly GeM.forward.
# ---------------------------------------------------------------------------
def gem_pallas(x, p, eps=1e-6, tile_m=256, block_bytes=4 * 1024 * 1024):
    B, C, N = x.shape
    M = B * C
    xf = x.reshape(M, N)

    itemsize = np.dtype(x.dtype).itemsize
    sublane = max(8, 32 // itemsize)              # 8 f32, 16 bf16, 32 int8/fp8

    # Static-p specialization (removes per-element exp/log from the stream).
    p_int = None
    if isinstance(p, (int, float, np.floating, np.integer)):
        pv = float(p)
        if pv > 0 and pv == round(pv) and pv <= 16:
            p_int = int(round(pv))

    # >=2 row tiles when possible so the "parallel" axis shards both v7x TCs.
    tm = min(tile_m, max(sublane, _round_up(-(-M // 2), sublane)))
    Mp = _round_up(M, tm)

    Np_full = _round_up(N, 128)
    single_pass = tm * Np_full * itemsize <= block_bytes
    if single_pass:
        tn, Np = Np_full, Np_full
    else:
        tn_max = max(128, (block_bytes // (tm * itemsize)) // 128 * 128)
        n_steps = -(-Np_full // tn_max)
        tn = _round_up(-(-Np_full // n_steps), 128)
        Np = tn * n_steps

    if (Mp, Np) != (M, N):
        # Pad with 0 (clamped to eps in-kernel); corrected in the finalize.
        xf = jnp.pad(xf, ((0, Mp - M), (0, Np - N)))
    pad_count = Np - N

    p_arr = jnp.asarray(p, jnp.float32).reshape(1)
    common = dict(eps=float(eps), n_valid=N, pad_count=pad_count, p_int=p_int)

    if single_pass:
        kernel = functools.partial(gem_single_kernel, **common)
        grid_spec = pltpu.PrefetchScalarGridSpec(
            num_scalar_prefetch=0,
            grid=(Mp // tm,),
            in_specs=[
                pl.BlockSpec(memory_space=pltpu.MemorySpace.SMEM),   # p (scalar)
                pl.BlockSpec((tm, Np), lambda i: (i, 0)),            # x row tile
            ],
            out_specs=pl.BlockSpec((tm, 1), lambda i: (i, 0)),
        )
        dims = ("parallel",)
    else:
        kernel = functools.partial(gem_multi_kernel, tn=tn, **common)
        grid_spec = pltpu.PrefetchScalarGridSpec(
            num_scalar_prefetch=0,
            grid=(Mp // tm, Np // tn),                 # reduction axis last
            in_specs=[
                pl.BlockSpec(memory_space=pltpu.MemorySpace.SMEM),
                pl.BlockSpec((tm, tn), lambda i, j: (i, j)),
            ],
            out_specs=pl.BlockSpec((tm, 1), lambda i, j: (i, 0)),
            scratch_shapes=[pltpu.VMEM((tm, 128), jnp.float32)],     # lane-dense acc
        )
        dims = ("parallel", "arbitrary")

    out = pl.pallas_call(
        kernel,
        out_shape=jax.ShapeDtypeStruct((Mp, 1), x.dtype),
        grid_spec=grid_spec,
        compiler_params=pltpu.CompilerParams(dimension_semantics=dims),
    )(p_arr, xf)

    return out[:M].reshape(B, C, 1)


# ---------------------------------------------------------------------------
# Pure-JAX reference (mirrors the PyTorch module exactly).
# ---------------------------------------------------------------------------
def gem_ref(x, p, eps=1e-6):
    xc = jnp.maximum(x, eps)                      # clamp(min=eps)
    xp = jnp.power(xc, p)
    m = jnp.mean(xp, axis=-1, keepdims=True)      # AdaptiveAvgPool1d(1)
    return jnp.power(m, 1.0 / p)


if __name__ == "__main__":
    key = jax.random.PRNGKey(0)
    k1, k2 = jax.random.split(key)
    eps = 1e-6

    # Case 1: static p=3 (VPU-only pow), ragged N -> padding + finalize correction.
    x1 = jax.random.normal(k1, (2, 48, 500), jnp.float32)
    out1 = jax.block_until_ready(gem_pallas(x1, 3.0, eps))
    ref1 = jax.block_until_ready(gem_ref(x1, 3.0, eps))
    assert out1.shape == (2, 48, 1)
    np.testing.assert_allclose(np.asarray(out1), np.asarray(ref1),
                               rtol=1e-4, atol=1e-5)

    # Case 2: runtime p (generic exp(p*log x) path), tile-aligned, single pass.
    p_rt = jnp.asarray(3.0, jnp.float32)          # nn.Parameter(torch.ones(1) * 3)
    x2 = jax.random.normal(k2, (2, 64, 512), jnp.float32)
    out2 = jax.block_until_ready(gem_pallas(x2, p_rt, eps))
    ref2 = jax.block_until_ready(gem_ref(x2, p_rt, eps))
    assert out2.shape == (2, 64, 1)
    np.testing.assert_allclose(np.asarray(out2), np.asarray(ref2),
                               rtol=1e-4, atol=1e-5)

    # Case 3: force the multi-step (resident accumulator) path with a tiny
    # block budget; runtime p + ragged N.
    out3 = jax.block_until_ready(gem_pallas(x1, p_rt, eps, block_bytes=64 * 1024))
    ref3 = jax.block_until_ready(gem_ref(x1, p_rt, eps))
    np.testing.assert_allclose(np.asarray(out3), np.asarray(ref3),
                               rtol=1e-4, atol=1e-5)

    assert bool(jnp.isfinite(out1).all() and jnp.isfinite(out2).all()
                and jnp.isfinite(out3).all())
    print("KERNEL_OK")
</pallas_src>

<mosaic_0001>
module attributes {stable_mosaic.version = 11 : i64} {
  func.func @gem_single_kernel(%arg0: i32, %arg1: memref<1xf32, #tpu.memory_space<smem>>, %arg2: memref<48x512xf32, #tpu.memory_space<vmem>>, %arg3: memref<48x1xf32, #tpu.memory_space<vmem>>) attributes {dimension_semantics = [#tpu.dimension_semantics<parallel>], iteration_bounds = array<i64: 2>, scalar_prefetch = 0 : i64, scratch_operands = 0 : i64, tpu.core_type = #tpu.core_type<tc>, window_params = [{transform_indices = @transform_0, window_bounds = array<i64: 1>}, {transform_indices = @transform_1, window_bounds = array<i64: 48, 512>}, {transform_indices = @transform_2, window_bounds = array<i64: 48, 1>}]} {
    %c0 = arith.constant 0 : index
    %c0_0 = arith.constant 0 : index
    %0 = vector.load %arg2[%c0, %c0_0] : memref<48x512xf32, #tpu.memory_space<vmem>>, vector<48x512xf32>
    %cst = arith.constant 9.99999997E-7 : f32
    %1 = vector.broadcast %cst : f32 to vector<48x512xf32>
    %2 = arith.maximumf %0, %1 : vector<48x512xf32>
    %3 = arith.mulf %2, %2 : vector<48x512xf32>
    %4 = arith.mulf %2, %3 : vector<48x512xf32>
    %cst_1 = arith.constant dense<0.000000e+00> : vector<48xf32>
    %5 = vector.multi_reduction <add>, %4, %cst_1 [1] : vector<48x512xf32> to vector<48xf32>
    %6 = vector.shape_cast %5 : vector<48xf32> to vector<48x1xf32>
    %cst_2 = arith.constant 1.200000e-17 : f32
    %7 = vector.broadcast %cst_2 : f32 to vector<48x1xf32>
    %8 = arith.subf %6, %7 : vector<48x1xf32>
    %cst_3 = arith.constant 2.000000e-03 : f32
    %9 = vector.broadcast %cst_3 : f32 to vector<48x1xf32>
    %10 = arith.mulf %8, %9 : vector<48x1xf32>
    %11 = math.log %10 : vector<48x1xf32>
    %cst_4 = arith.constant 0.333333343 : f32
    %12 = vector.broadcast %cst_4 : f32 to vector<48x1xf32>
    %13 = arith.mulf %11, %12 : vector<48x1xf32>
    %14 = math.exp %13 : vector<48x1xf32>
    %c0_5 = arith.constant 0 : index
    %c0_6 = arith.constant 0 : index
    %15 = vector.load %arg3[%c0_5, %c0_6] : memref<48x1xf32, #tpu.memory_space<vmem>>, vector<48x1xf32>
    tpu.vector_store %arg3[%c0_5, %c0_6], %14 {strides = array<i32>} : memref<48x1xf32, #tpu.memory_space<vmem>>, vector<48x1xf32>,
    return
  }
  func.func @transform_0(%arg0: i32) -> i32 {
    %c0_i32 = arith.constant 0 : i32
    %c0_i32_0 = arith.constant 0 : i32
    return %c0_i32 : i32
  }
  func.func @transform_1(%arg0: i32) -> (i32, i32) {
    %c0_i32 = arith.constant 0 : i32
    %c0_i32_0 = arith.constant 0 : i32
    return %arg0, %c0_i32 : i32, i32
  }
  func.func @transform_2(%arg0: i32) -> (i32, i32) {
    %c0_i32 = arith.constant 0 : i32
    %c0_i32_0 = arith.constant 0 : i32
    return %arg0, %c0_i32 : i32, i32
  }
}

</mosaic_0001>

<llo_original>
// kernel: tpu_custom_call.1
$region0: #{tpu_custom_call.1}
  #allocation0 [shape = 'u32[]', space=smem, size = 0x4, offset = 0x4, fixed_abs, tag = 'smem constant byte address 0x4 - core index']
  #allocation1 [shape = 'u32[72,128]{1,0:T(1,128)}', space=vmem, size = 0x9000, scoped, tag = 'internal scratch']
  #allocation2 [shape = 'f32[1]{0:T(128)S(6)}', space=smem, size = 0x200, scoped, tag = 'scoped memory for tpu_custom_call.1']
  %s0 = inlined_call_operand.<no memory space> [shape: f32[1], index: 0, kind: input, shape index: {}]
  %s1 = inlined_call_operand.hbm [shape: f32[96,512], index: 1, kind: input, shape index: {}]
  %s2 = inlined_call_operand.vmem [shape: f32[96,1], index: 2, kind: output, shape index: {}]
  %s3 = sld [smem:[#allocation0]]
  $region45: #{tpu_custom_call.1} parent=0
    _
  %s5 = ssub.s32 1, %s3
  %s6 = scalar_select 0, %s5, %s3
  %7 = sst [smem:[#allocation2]] %s0
  $region1: #{tpu_custom_call.1} parent=0
    #allocation3 [shape = 'u8[196608]{0}', space=vmem, size = 0x30000, scoped, tag = 'input window, operand 1']
    #allocation4 [shape = 's32[2]{0}', space=sflag, size = 0x8, scoped, tag = 'scoped memory for tpu_custom_call.1']
    %8 = vsyncpa [#allocation4], 0
    %s9 = scalar_lea.sflag [#allocation4], 1
    %10 = vsyncpa %s9, 0
    loop: start=0, step=1, limit=4
    $region2: #{tpu_custom_call.1} parent=1 // loop_pre_header
      _
    $region3: #{tpu_custom_call.1} parent=1 // loop_header
      %s12 = sphi 0, %s16
      %p13 = scmp.ge.s32.totalorder %s12, 4
      %s20 = sphi 0, %s20
      %s22 = sphi 0, %s20
      %s23 = sphi 0, %s22
      %s37 = sphi 0, %s23
      %s43 = sphi 0, %s45
      %s46 = sphi 0, %s43
      %s47 = sphi 0, %s46
      %s63 = sphi 0, %s47
      %s69 = sphi 0, %s71
      %s72 = sphi 0, %s69
      %s73 = sphi 0, %s72
      %s89 = sphi 0, %s73
    $region4: #{tpu_custom_call.1} parent=1 // loop_header_branch
      %15 = sbr.rel (%p13) target = $region8
    $region5: #{tpu_custom_call.1} parent=1 // loop_body
      %s17 = ssub.s32 %s12, 1
      %s18 = ssub.s32 %s12, 2
      %s19 = sadd.s32 %s12, 1
      %s21 = sadd.s32 %s20, 1
      %p24 = scmp.eq.s32.totalorder %s12, 1
      %p25 = scmp.ne.s32.totalorder %s20, %s22
      %p26 = scmp.eq.s32.totalorder %s12, 0
      %p27 = por %p25, %p26
      %p28 = scmp.ne.s32.totalorder %s20, %s22
      %p29 = scmp.eq.s32.totalorder %s17, 1
      %p30 = por %p28, %p29
      %p31 = scmp.ne.s32.totalorder %s22, %s23
      %p32 = scmp.eq.s32.totalorder %s17, 0
      %p33 = por %p31, %p32
      %p34 = scmp.ne.s32.totalorder %s22, %s23
      %p35 = scmp.eq.s32.totalorder %s18, 1
      %p36 = por %p34, %p35
      %p38 = scmp.ne.s32.totalorder %s23, %s37
      %p39 = scmp.eq.s32.totalorder %s18, 0
      %p40 = por %p38, %p39
      %s41 = ssub.s32 %s12, %s19
      %p42 = scmp.eq.s32.totalorder %s41, 0
      %s44 = sadd.s32 %s43, 1
      %s45 = scalar_select %p42, %s43, %s44
      %p48 = pneg %p42
      %p49 = scmp.eq.s32.totalorder %s12, 1
      %p50 = por %p48, %p49
      %p51 = scmp.ne.s32.totalorder %s43, %s46
      %p52 = scmp.eq.s32.totalorder %s12, 0
      %p53 = por %p51, %p52
      %p54 = scmp.ne.s32.totalorder %s43, %s46
      %p55 = scmp.eq.s32.totalorder %s17, 1
      %p56 = por %p54, %p55
      %p57 = scmp.ne.s32.totalorder %s46, %s47
      %p58 = scmp.eq.s32.totalorder %s17, 0
      %p59 = por %p57, %p58
      %p60 = scmp.ne.s32.totalorder %s46, %s47
      %p61 = scmp.eq.s32.totalorder %s18, 1
      %p62 = por %p60, %p61
      %p64 = scmp.ne.s32.totalorder %s47, %s63
      %p65 = scmp.eq.s32.totalorder %s18, 0
      %p66 = por %p64, %p65
      %s67 = ssub.s32 %s12, %s19
      %p68 = scmp.eq.s32.totalorder %s67, 0
      %s70 = sadd.s32 %s69, 1
      %s71 = scalar_select %p68, %s69, %s70
      %p74 = pneg %p68
      %p75 = scmp.eq.s32.totalorder %s12, 1
      %p76 = por %p74, %p75
      %p77 = scmp.ne.s32.totalorder %s69, %s72
      %p78 = scmp.eq.s32.totalorder %s12, 0
      %p79 = por %p77, %p78
      %p80 = scmp.ne.s32.totalorder %s69, %s72
      %p81 = scmp.eq.s32.totalorder %s17, 1
      %p82 = por %p80, %p81
      %p83 = scmp.ne.s32.totalorder %s72, %s73
      %p84 = scmp.eq.s32.totalorder %s17, 0
      %p85 = por %p83, %p84
      %p86 = scmp.ne.s32.totalorder %s72, %s73
      %p87 = scmp.eq.s32.totalorder %s18, 1
      %p88 = por %p86, %p87
      %p90 = scmp.ne.s32.totalorder %s73, %s89
      %p91 = scmp.eq.s32.totalorder %s18, 0
      %p92 = por %p90, %p91
      %p93 = scmp.le.s32.totalorder 1, %s12
      %p94 = scmp.lt.s32.totalorder %s12, 3
      %p95 = pnand %p93, %p94
      %p96 = pneg %p95
      // Predicated region
      $region9: #{tpu_custom_call.1} parent=5 // pred_check
        _
      $region10: #{tpu_custom_call.1} parent=5 // pred_check_branch
        %98 = sbr.rel (%p95) target = $region12
      $region11: #{tpu_custom_call.1} parent=5 // pred_region
        %s99 = ssub.s32 %s12, 1
        // Predicated region
        $region13: #{tpu_custom_call.1} parent=11 // pred_check
          %p100 = pneg %p33
        $region14: #{tpu_custom_call.1} parent=11 // pred_check_branch
          %102 = sbr.rel (%p100) target = $region16
        $region15: #{tpu_custom_call.1} parent=11 // pred_region
          _
        $region16: #{tpu_custom_call.1} parent=11 // pred_fallthru
          _
      $region12: #{tpu_custom_call.1} parent=5 // pred_fallthru
        _
      %p103 = scmp.lt.s32.totalorder %s12, 2
      // Predicated region
      $region17: #{tpu_custom_call.1} parent=5 // pred_check
        %p104 = pneg %p103
      $region18: #{tpu_custom_call.1} parent=5 // pred_check_branch
        %106 = sbr.rel (%p104) target = $region20
      $region19: #{tpu_custom_call.1} parent=5 // pred_region
        // Predicated region
        $region21: #{tpu_custom_call.1} parent=19 // pred_check
          %p107 = pneg %p53
        $region22: #{tpu_custom_call.1} parent=19 // pred_check_branch
          %109 = sbr.rel (%p107) target = $region24
        $region23: #{tpu_custom_call.1} parent=19 // pred_region
          %s110 = sand.u32 %s43, 1
          %s111 = scalar_lea.sflag [#allocation4], %s110
          %s112 = sand.u32 %s43, 1
          %s113 = smul.addr %s112, 192
          %s114 = scalar_lea.vmem [#allocation3], %s113
          %s115 = smul.u32 6, %s12
          %117 = vsyncadd %s111, 0
          %s118 = smul.addr %s115, 4
          %s119 = smul.addr %s118, 8
          %s120 = scalar_lea.hbm %s1, %s119
          %s121 = sshll.u32 %s120, 4
          %s122 = int_to_ptr.hbm [resolvable:$true] %s121
          %s123 = sshll.u32 %s114, 4
          %s124 = int_to_ptr.vmem [resolvable:$true] %s123
          %129 = dma.hbm_to_vmem [thread:$0]  %s122, 3072, %s124, %s111, 512, 512, 32
        $region24: #{tpu_custom_call.1} parent=19 // pred_fallthru
          _
      $region20: #{tpu_custom_call.1} parent=5 // pred_fallthru
        _
      %p130 = scmp.le.s32.totalorder 1, %s12
      %p131 = scmp.lt.s32.totalorder %s12, 3
      %p132 = pnand %p130, %p131
      %p133 = pneg %p132
      // Predicated region
      $region25: #{tpu_custom_call.1} parent=5 // pred_check
        _
      $region26: #{tpu_custom_call.1} parent=5 // pred_check_branch
        %135 = sbr.rel (%p132) target = $region28
      $region27: #{tpu_custom_call.1} parent=5 // pred_region
        %s136 = ssub.s32 %s12, 1
        %s137 = sand.u32 %s46, 1
        %s138 = scalar_lea.sflag [#allocation4], %s137
        %s139 = sand.u32 %s46, 1
        %s140 = smul.addr %s139, 192
        %s141 = scalar_lea.vmem [#allocation3], %s140
        // Predicated region
        $region29: #{tpu_custom_call.1} parent=27 // pred_check
          %p142 = pneg %p59
        $region30: #{tpu_custom_call.1} parent=27 // pred_check_branch
          %144 = sbr.rel (%p142) target = $region32
        $region31: #{tpu_custom_call.1} parent=27 // pred_region
          %146 = dma.done %s138, 3072
        $region32: #{tpu_custom_call.1} parent=27 // pred_fallthru
          _
        %p147 = pneg %p33
        %p148 = pneg %p30
        %s149 = sand.u32 %s46, 1
        %s150 = scalar_lea.sflag [#allocation4], %s149
        %s151 = sand.u32 %s46, 1
        %s152 = smul.addr %s151, 192
        %s153 = scalar_lea.vmem [#allocation3], %s152
        %p154 = pneg %p59
        %p155 = pneg %p56
        %p156 = pneg %p85
        %p157 = pneg %p82
        %s158 = smul.u32 6, %s17
        %p159 = scmp.lt.s32.totalorder %s158, 11
        %s160 = scalar_select %p159, %s158, 11
        %s161 = smul.addr %s160, 8
        %s162 = scalar_lea.vmem %s2, %s161
        %s163 = smul.u32 6, %s17
        %s164 = smul.u32 6, %s17
        %p165 = scmp.lt.s32.totalorder %s164, 11
        %s166 = scalar_select %p165, %s164, 11
        %s167 = smul.addr %s166, 8
        %s168 = scalar_lea.vmem %s2, %s167
        %s169 = smul.u32 6, %s17
        %v170 = vld [vmem:[%s141] sm:$0xff]
        %v171 = vld [vmem:[%s141 + $0x8] sm:$0xff]
        %v172 = vld [vmem:[%s141 + $0x10] sm:$0xff]
        %v173 = vld [vmem:[%s141 + $0x18] sm:$0xff]
        %v174 = vld [vmem:[%s141 + $0x20] sm:$0xff]
        %v175 = vld [vmem:[%s141 + $0x28] sm:$0xff]
        %v176 = vld [vmem:[%s141 + $0x30] sm:$0xff]
        %v177 = vld [vmem:[%s141 + $0x38] sm:$0xff]
        %v178 = vld [vmem:[%s141 + $0x40] sm:$0xff]
        %v179 = vld [vmem:[%s141 + $0x48] sm:$0xff]
        %v180 = vld [vmem:[%s141 + $0x50] sm:$0xff]
        %v181 = vld [vmem:[%s141 + $0x58] sm:$0xff]
        %v182 = vld [vmem:[%s141 + $0x60] sm:$0xff]
        %v183 = vld [vmem:[%s141 + $0x68] sm:$0xff]
        %v184 = vld [vmem:[%s141 + $0x70] sm:$0xff]
        %v185 = vld [vmem:[%s141 + $0x78] sm:$0xff]
        %v186 = vld [vmem:[%s141 + $0x80] sm:$0xff]
        %v187 = vld [vmem:[%s141 + $0x88] sm:$0xff]
        %v188 = vld [vmem:[%s141 + $0x90] sm:$0xff]
        %v189 = vld [vmem:[%s141 + $0x98] sm:$0xff]
        %v190 = vld [vmem:[%s141 + $0xa0] sm:$0xff]
        %v191 = vld [vmem:[%s141 + $0xa8] sm:$0xff]
        %v192 = vld [vmem:[%s141 + $0xb0] sm:$0xff]
        %v193 = vld [vmem:[%s141 + $0xb8] sm:$0xff]
        %v194 = vmax.f32 %v170, 1e-06
        %v195 = vmax.f32 %v171, 1e-06
        %v196 = vmax.f32 %v172, 1e-06
        %v197 = vmax.f32 %v173, 1e-06
        %v198 = vmax.f32 %v174, 1e-06
        %v199 = vmax.f32 %v175, 1e-06
        %v200 = vmax.f32 %v176, 1e-06
        %v201 = vmax.f32 %v177, 1e-06
        %v202 = vmax.f32 %v178, 1e-06
        %v203 = vmax.f32 %v179, 1e-06
        %v204 = vmax.f32 %v180, 1e-06
        %v205 = vmax.f32 %v181, 1e-06
        %v206 = vmax.f32 %v182, 1e-06
        %v207 = vmax.f32 %v183, 1e-06
        %v208 = vmax.f32 %v184, 1e-06
        %v209 = vmax.f32 %v185, 1e-06
        %v210 = vmax.f32 %v186, 1e-06
        %v211 = vmax.f32 %v187, 1e-06
        %v212 = vmax.f32 %v188, 1e-06
        %v213 = vmax.f32 %v189, 1e-06
        %v214 = vmax.f32 %v190, 1e-06
        %v215 = vmax.f32 %v191, 1e-06
        %v216 = vmax.f32 %v192, 1e-06
        %v217 = vmax.f32 %v193, 1e-06
        %v218 = vmul.f32 %v194, %v194
        %v219 = vmul.f32 %v195, %v195
        %v220 = vmul.f32 %v196, %v196
        %v221 = vmul.f32 %v197, %v197
        %v222 = vmul.f32 %v198, %v198
        %v223 = vmul.f32 %v199, %v199
        %v224 = vmul.f32 %v200, %v200
        %v225 = vmul.f32 %v201, %v201
        %v226 = vmul.f32 %v202, %v202
        %v227 = vmul.f32 %v203, %v203
        %v228 = vmul.f32 %v204, %v204
        %v229 = vmul.f32 %v205, %v205
        %v230 = vmul.f32 %v206, %v206
        %v231 = vmul.f32 %v207, %v207
        %v232 = vmul.f32 %v208, %v208
        %v233 = vmul.f32 %v209, %v209
        %v234 = vmul.f32 %v210, %v210
        %v235 = vmul.f32 %v211, %v211
        %v236 = vmul.f32 %v212, %v212
        %v237 = vmul.f32 %v213, %v213
        %v238 = vmul.f32 %v214, %v214
        %v239 = vmul.f32 %v215, %v215
        %v240 = vmul.f32 %v216, %v216
        %v241 = vmul.f32 %v217, %v217
        %v242 = vmul.f32 %v194, %v218
        %v243 = vmul.f32 %v195, %v219
        %v244 = vmul.f32 %v196, %v220
        %v245 = vmul.f32 %v197, %v221
        %v246 = vmul.f32 %v198, %v222
        %v247 = vmul.f32 %v199, %v223
        %v248 = vmul.f32 %v200, %v224
        %v249 = vmul.f32 %v201, %v225
        %v250 = vmul.f32 %v202, %v226
        %v251 = vmul.f32 %v203, %v227
        %v252 = vmul.f32 %v204, %v228
        %v253 = vmul.f32 %v205, %v229
        %v254 = vmul.f32 %v206, %v230
        %v255 = vmul.f32 %v207, %v231
        %v256 = vmul.f32 %v208, %v232
        %v257 = vmul.f32 %v209, %v233
        %v258 = vmul.f32 %v210, %v234
        %v259 = vmul.f32 %v211, %v235
        %v260 = vmul.f32 %v212, %v236
        %v261 = vmul.f32 %v213, %v237
        %v262 = vmul.f32 %v214, %v238
        %v263 = vmul.f32 %v215, %v239
        %v264 = vmul.f32 %v216, %v240
        %v265 = vmul.f32 %v217, %v241
        %v266 = vadd.f32 %v242, %v243
        %v267 = vadd.f32 %v266, %v244
        %v268 = vadd.f32 %v267, %v245
        %269 = vadd.xlane.f32.xlu0 %v268
        %v270 = vpop.xlane.xlu0 %269
        %v271 = vadd.f32 %v246, %v247
        %v272 = vadd.f32 %v271, %v248
        %v273 = vadd.f32 %v272, %v249
        %274 = vadd.xlane.f32.xlu0 %v273
        %v275 = vpop.xlane.xlu0 %274
        %v276 = vadd.f32 %v250, %v251
        %v277 = vadd.f32 %v276, %v252
        %v278 = vadd.f32 %v277, %v253
        %279 = vadd.xlane.f32.xlu0 %v278
        %v280 = vpop.xlane.xlu0 %279
        %v281 = vadd.f32 %v254, %v255
        %v282 = vadd.f32 %v281, %v256
        %v283 = vadd.f32 %v282, %v257
        %284 = vadd.xlane.f32.xlu0 %v283
        %v285 = vpop.xlane.xlu0 %284
        %v286 = vadd.f32 %v258, %v259
        %v287 = vadd.f32 %v286, %v260
        %v288 = vadd.f32 %v287, %v261
        %289 = vadd.xlane.f32.xlu0 %v288
        %v290 = vpop.xlane.xlu0 %289
        %v291 = vadd.f32 %v262, %v263
        %v292 = vadd.f32 %v291, %v264
        %v293 = vadd.f32 %v292, %v265
        %294 = vadd.xlane.f32.xlu0 %v293
        %v295 = vpop.xlane.xlu0 %294
        %v296 = vsub.f32 %v270, 1.2e-17
        %v297 = vsub.f32 %v275, 1.2e-17
        %v298 = vsub.f32 %v280, 1.2e-17
        %v299 = vsub.f32 %v285, 1.2e-17
        %v300 = vsub.f32 %v290, 1.2e-17
        %v301 = vsub.f32 %v295, 1.2e-17
        %v302 = vmul.f32 %v296, 0.002
        %v303 = vmul.f32 %v297, 0.002
        %v304 = vmul.f32 %v298, 0.002
        %v305 = vmul.f32 %v299, 0.002
        %v306 = vmul.f32 %v300, 0.002
        %v307 = vmul.f32 %v301, 0.002
        %v308 = vlog2.pop %v302
        %v309 = vmul.f32 %v308, 0.6931472
        %v310 = vlog2.pop %v303
        %v311 = vmul.f32 %v310, 0.6931472
        %v312 = vlog2.pop %v304
        %v313 = vmul.f32 %v312, 0.6931472
        %v314 = vlog2.pop %v305
        %v315 = vmul.f32 %v314, 0.6931472
        %v316 = vlog2.pop %v306
        %v317 = vmul.f32 %v316, 0.6931472
        %v318 = vlog2.pop %v307
        %v319 = vmul.f32 %v318, 0.6931472
        %v320 = vmul.f32 %v309, 0.33333334
        %v321 = vmul.f32 %v311, 0.33333334
        %v322 = vmul.f32 %v313, 0.33333334
        %v323 = vmul.f32 %v315, 0.33333334
        %v324 = vmul.f32 %v317, 0.33333334
        %v325 = vmul.f32 %v319, 0.33333334
        %v326 = vmul.f32 %v320, 1.442695
        %v327 = vpow.pop %v326
        %v328 = vmul.f32 %v321, 1.442695
        %v329 = vpow.pop %v328
        %v330 = vmul.f32 %v322, 1.442695
        %v331 = vpow.pop %v330
        %v332 = vmul.f32 %v323, 1.442695
        %v333 = vpow.pop %v332
        %v334 = vmul.f32 %v324, 1.442695
        %v335 = vpow.pop %v334
        %v336 = vmul.f32 %v325, 1.442695
        %v337 = vpow.pop %v336
        %vm338 = vcmask 7168
        %339 = vst.msk [vmem:[%s168] sm:$0xff] %vm338, %v327
        %340 = vst.msk [vmem:[%s168 + $0x8] sm:$0xff] %vm338, %v329
        %341 = vst.msk [vmem:[%s168 + $0x10] sm:$0xff] %vm338, %v331
        %342 = vst.msk [vmem:[%s168 + $0x18] sm:$0xff] %vm338, %v333
        %343 = vst.msk [vmem:[%s168 + $0x20] sm:$0xff] %vm338, %v335
        %344 = vst.msk [vmem:[%s168 + $0x28] sm:$0xff] %vm338, %v337
        %s345 = smul.u32 6, %s17
        %p346 = scmp.lt.s32.totalorder %s345, 11
        %s347 = scalar_select %p346, %s345, 11
        %s348 = smul.addr %s347, 8
        %s349 = scalar_lea.vmem %s2, %s348
        // Predicated region
        $region33: #{tpu_custom_call.1} parent=27 // pred_check
          %p350 = pneg %p82
        $region34: #{tpu_custom_call.1} parent=27 // pred_check_branch
          %352 = sbr.rel (%p350) target = $region36
        $region35: #{tpu_custom_call.1} parent=27 // pred_region
          %s353 = smul.u32 6, %s17
        $region36: #{tpu_custom_call.1} parent=27 // pred_fallthru
          _
      $region28: #{tpu_custom_call.1} parent=5 // pred_fallthru
        _
      %p354 = scmp.le.s32.totalorder 2, %s12
      // Predicated region
      $region37: #{tpu_custom_call.1} parent=5 // pred_check
        %p355 = pneg %p354
      $region38: #{tpu_custom_call.1} parent=5 // pred_check_branch
        %357 = sbr.rel (%p355) target = $region40
      $region39: #{tpu_custom_call.1} parent=5 // pred_region
        %s358 = ssub.s32 %s12, 2
        // Predicated region
        $region41: #{tpu_custom_call.1} parent=39 // pred_check
          %p359 = pneg %p88
        $region42: #{tpu_custom_call.1} parent=39 // pred_check_branch
          %361 = sbr.rel (%p359) target = $region44
        $region43: #{tpu_custom_call.1} parent=39 // pred_region
          %s362 = smul.u32 6, %s18
          %p363 = scmp.lt.s32.totalorder %s362, 11
          %s364 = scalar_select %p363, %s362, 11
          %s365 = smul.addr %s364, 8
          %s366 = scalar_lea.vmem %s2, %s365
        $region44: #{tpu_custom_call.1} parent=39 // pred_fallthru
          _
      $region40: #{tpu_custom_call.1} parent=5 // pred_fallthru
        _
    $region6: #{tpu_custom_call.1} parent=1 // loop_footer
      %s16 = sadd.s32 1, %s12
    $region7: #{tpu_custom_call.1} parent=1 // loop_footer_branch
      %11 = sbr.rel target = $region3
    $region8: #{tpu_custom_call.1} parent=1 // loop_exit
      _
    %367 = vsyncpa [#allocation4], 1
    %s368 = scalar_lea.sflag [#allocation4], 1
    %369 = vsyncpa %s368, 1

</llo_original>
